<compile_context>
chip_gen: v6e
topology: v6e:2x2x1
jax: 0.10.0
libtpu: 0.0.40
codegen_flags: <defaults>
</compile_context>

<pallas_src>
import functools
import math

import jax
import jax.numpy as jnp
from jax.experimental import pallas as pl
from jax.experimental.pallas import tpu as pltpu  # noqa: F401


def _attn_kernel(x_ref, wq_ref, wk_ref, u_ref, out_ref, *,
                 logit_scale, inv_tau, hard):
    # x_ref:  (B, N, F)  input objects
    # wq_ref: (H, F)     torch-layout Wq weight
    # wk_ref: (H, F)     torch-layout Wk weight
    # u_ref:  (B, N)     raw uniform(0,1) samples (torch.rand_like equivalent)
    # out_ref:(B, N)     attention distribution
    x = x_ref[...]                                            # (B, N, F)
    wq = wq_ref[...]                                          # (H, F)
    wk = wk_ref[...]                                          # (H, F)
    u = u_ref[...]                                            # (B, N)

    # Global query from the mean over objects; the 1/N of the mean is folded into
    # logit_scale, so only a sum is needed here.
    xs = jnp.sum(x, axis=1)                                   # (B, F)

    # Q[b,h]  = sum_f xs[b,f] * Wq[h,f]        (VPU multiply + lane reduce)
    q = jnp.sum(xs[:, None, :] * wq[None, :, :], axis=-1)     # (B, H)
    # QK[b,f] = sum_h Q[b,h] * Wk[h,f]         (VPU multiply + sublane reduce)
    qk = jnp.sum(q[:, :, None] * wk[None, :, :], axis=1)      # (B, F)
    # logits[b,n] = sum_f QK[b,f] * x[b,n,f]   (== Q . K^T, K never materialized)
    logits = jnp.sum(qk[:, None, :] * x, axis=-1)             # (B, N)
    # One fused scale: 1/N (mean), 1/sqrt(H) and 1/tau.
    logits = logits * jnp.float32(logit_scale)

    # Gumbel noise from raw uniforms, pre-scaled by 1/tau (EUP logs).
    g = -jnp.log(-jnp.log(u + 1e-10) + 1e-10) * jnp.float32(inv_tau)
    y = logits + g                                            # (B, N)

    if hard:
        # Forward value of the straight-through estimator is exactly the one-hot of the
        # row argmax of (logits + noise); softmax is monotone so it can be skipped.
        m = jnp.max(y, axis=-1, keepdims=True)                # (B, 1)
        lane = jax.lax.broadcasted_iota(jnp.int32, y.shape, 1)
        n_lanes = y.shape[-1]
        idx = jnp.min(jnp.where(y == m, lane, n_lanes),
                      axis=-1, keepdims=True)                 # first max (torch-style)
        out = jnp.where(lane == idx, 1.0, 0.0)
    else:
        y = y - jnp.max(y, axis=-1, keepdims=True)
        e = jnp.exp(y)
        out = e / jnp.sum(e, axis=-1, keepdims=True)          # exact divide

    out_ref[...] = out.astype(out_ref.dtype)


def dot_product_attention(x, wq, wk, uniform_noise, tau=1.0, hard=False):
    """x: (B, N, F); wq, wk: (H, F) torch-layout Linear weights;
    uniform_noise: (B, N) U(0,1) samples -> att_dist (B, N)."""
    B, N, Fdim = x.shape
    H = wq.shape[0]

    kernel = functools.partial(
        _attn_kernel,
        logit_scale=1.0 / (N * math.sqrt(H) * float(tau)),
        inv_tau=1.0 / float(tau),
        hard=bool(hard),
    )

    # Single grid step: every block is the full array (satisfies the (8,128) rule via
    # "block == full dims"); the whole forward is one pallas_call.
    return pl.pallas_call(
        kernel,
        out_shape=jax.ShapeDtypeStruct((B, N), jnp.float32),
        in_specs=[
            pl.BlockSpec((B, N, Fdim), lambda: (0, 0, 0)),   # x
            pl.BlockSpec((H, Fdim), lambda: (0, 0)),         # Wq (torch layout)
            pl.BlockSpec((H, Fdim), lambda: (0, 0)),         # Wk (torch layout)
            pl.BlockSpec((B, N), lambda: (0, 0)),            # uniform noise
        ],
        out_specs=pl.BlockSpec((B, N), lambda: (0, 0)),
    )(x, wq, wk, uniform_noise)


def _reference(x, wq, wk, uniform_noise, tau=1.0, hard=False):
    # Pure-JAX mirror of the PyTorch forward (torch-layout (H, F) weights).
    x_mean = jnp.mean(x, axis=1)                              # (B, F)
    q = x_mean @ wq.T                                         # (B, H)
    k = jnp.einsum("bnf,hf->bnh", x, wk)                      # (B, N, H)
    logits = jnp.einsum("bh,bnh->bn", q, k) / math.sqrt(k.shape[-1])
    g = -jnp.log(-jnp.log(uniform_noise + 1e-10) + 1e-10)
    y = jax.nn.softmax((logits + g) / tau, axis=-1)
    if hard:
        y = jax.nn.one_hot(jnp.argmax(y, axis=-1), y.shape[-1], dtype=y.dtype)
    return y


if __name__ == "__main__":
    B, N, Fdim, H = 2, 8, 32, 32
    tau = 1.0

    key = jax.random.PRNGKey(0)
    kx, kq, kk, kg = jax.random.split(key, 4)

    x = jax.random.normal(kx, (B, N, Fdim), dtype=jnp.float32)

    # nn.Linear(feature_dim, hidden_dim, bias=False): weight shape (H, F),
    # init U(-1/sqrt(fan_in), 1/sqrt(fan_in)).  Wv / out_proj don't affect att_dist.
    bound = 1.0 / math.sqrt(Fdim)
    wq = jax.random.uniform(kq, (H, Fdim), jnp.float32, -bound, bound)
    wk = jax.random.uniform(kk, (H, Fdim), jnp.float32, -bound, bound)

    # Raw uniform samples (torch.rand_like equivalent); the Gumbel transform happens
    # inside the kernel.
    u = jax.random.uniform(kg, (B, N), dtype=jnp.float32)

    # jit the wrapper so each forward is a single fusion + one pallas_call.
    fwd_soft = jax.jit(functools.partial(dot_product_attention, tau=tau, hard=False))
    fwd_hard = jax.jit(functools.partial(dot_product_attention, tau=tau, hard=True))

    att_soft = jax.block_until_ready(fwd_soft(x, wq, wk, u))
    att_hard = jax.block_until_ready(fwd_hard(x, wq, wk, u))

    ref_soft = _reference(x, wq, wk, u, tau=tau, hard=False)
    ref_hard = _reference(x, wq, wk, u, tau=tau, hard=True)

    assert att_soft.shape == (B, N) and att_hard.shape == (B, N)
    assert bool(jnp.allclose(att_soft, ref_soft, atol=1e-5, rtol=1e-5)), \
        "soft path mismatch vs reference"
    assert bool(jnp.allclose(jnp.sum(att_soft, axis=-1), 1.0, atol=1e-5))
    assert bool(jnp.allclose(att_hard, ref_hard, atol=1e-6)), \
        "hard path mismatch vs reference"
    print("KERNEL_OK")
</pallas_src>

<mosaic_0001>
module attributes {stable_mosaic.version = 11 : i64} {
  func.func @_attn_kernel(%arg0: memref<2x8x32xf32, #tpu.memory_space<vmem>>, %arg1: memref<32x32xf32, #tpu.memory_space<vmem>>, %arg2: memref<32x32xf32, #tpu.memory_space<vmem>>, %arg3: memref<2x8xf32, #tpu.memory_space<vmem>>, %arg4: memref<2x8xf32, #tpu.memory_space<vmem>>) attributes {dimension_semantics = [], scalar_prefetch = 0 : i64, scratch_operands = 0 : i64, tpu.core_type = #tpu.core_type<tc>} {
    %c0 = arith.constant 0 : index
    %c0_0 = arith.constant 0 : index
    %c0_1 = arith.constant 0 : index
    %0 = vector.load %arg0[%c0, %c0_0, %c0_1] : memref<2x8x32xf32, #tpu.memory_space<vmem>>, vector<2x8x32xf32>
    %c0_2 = arith.constant 0 : index
    %c0_3 = arith.constant 0 : index
    %1 = vector.load %arg1[%c0_2, %c0_3] : memref<32x32xf32, #tpu.memory_space<vmem>>, vector<32x32xf32>
    %c0_4 = arith.constant 0 : index
    %c0_5 = arith.constant 0 : index
    %2 = vector.load %arg2[%c0_4, %c0_5] : memref<32x32xf32, #tpu.memory_space<vmem>>, vector<32x32xf32>
    %c0_6 = arith.constant 0 : index
    %c0_7 = arith.constant 0 : index
    %3 = vector.load %arg3[%c0_6, %c0_7] : memref<2x8xf32, #tpu.memory_space<vmem>>, vector<2x8xf32>
    %cst = arith.constant dense<0.000000e+00> : vector<2x32xf32>
    %4 = vector.multi_reduction <add>, %0, %cst [1] : vector<2x8x32xf32> to vector<2x32xf32>
    %5 = vector.shape_cast %4 : vector<2x32xf32> to vector<2x1x32xf32>
    %6 = vector.shape_cast %1 : vector<32x32xf32> to vector<1x32x32xf32>
    %7 = vector.broadcast %5 : vector<2x1x32xf32> to vector<2x32x32xf32>
    %8 = vector.broadcast %6 : vector<1x32x32xf32> to vector<2x32x32xf32>
    %9 = arith.mulf %7, %8 : vector<2x32x32xf32>
    %cst_8 = arith.constant dense<0.000000e+00> : vector<2x32xf32>
    %10 = vector.multi_reduction <add>, %9, %cst_8 [2] : vector<2x32x32xf32> to vector<2x32xf32>
    %11 = vector.shape_cast %10 : vector<2x32xf32> to vector<2x32x1xf32>
    %12 = vector.shape_cast %2 : vector<32x32xf32> to vector<1x32x32xf32>
    %13 = vector.broadcast %11 : vector<2x32x1xf32> to vector<2x32x32xf32>
    %14 = vector.broadcast %12 : vector<1x32x32xf32> to vector<2x32x32xf32>
    %15 = arith.mulf %13, %14 : vector<2x32x32xf32>
    %cst_9 = arith.constant dense<0.000000e+00> : vector<2x32xf32>
    %16 = vector.multi_reduction <add>, %15, %cst_9 [1] : vector<2x32x32xf32> to vector<2x32xf32>
    %17 = vector.shape_cast %16 : vector<2x32xf32> to vector<2x1x32xf32>
    %18 = vector.broadcast %17 : vector<2x1x32xf32> to vector<2x8x32xf32>
    %19 = arith.mulf %18, %0 : vector<2x8x32xf32>
    %cst_10 = arith.constant dense<0.000000e+00> : vector<2x8xf32>
    %20 = vector.multi_reduction <add>, %19, %cst_10 [2] : vector<2x8x32xf32> to vector<2x8xf32>
    %cst_11 = arith.constant 0.0220970865 : f32
    %21 = vector.broadcast %cst_11 : f32 to vector<2x8xf32>
    %22 = arith.mulf %20, %21 : vector<2x8xf32>
    %cst_12 = arith.constant 1.000000e-10 : f32
    %23 = vector.broadcast %cst_12 : f32 to vector<2x8xf32>
    %24 = arith.addf %3, %23 : vector<2x8xf32>
    %25 = math.log %24 : vector<2x8xf32>
    %cst_13 = arith.constant 0.000000e+00 : f32
    %26 = vector.broadcast %cst_13 : f32 to vector<2x8xf32>
    %27 = arith.subf %26, %25 : vector<2x8xf32>
    %cst_14 = arith.constant 1.000000e-10 : f32
    %28 = vector.broadcast %cst_14 : f32 to vector<2x8xf32>
    %29 = arith.addf %27, %28 : vector<2x8xf32>
    %30 = math.log %29 : vector<2x8xf32>
    %cst_15 = arith.constant 0.000000e+00 : f32
    %31 = vector.broadcast %cst_15 : f32 to vector<2x8xf32>
    %32 = arith.subf %31, %30 : vector<2x8xf32>
    %cst_16 = arith.constant 1.000000e+00 : f32
    %33 = vector.broadcast %cst_16 : f32 to vector<2x8xf32>
    %34 = arith.mulf %32, %33 : vector<2x8xf32>
    %35 = arith.addf %22, %34 : vector<2x8xf32>
    %cst_17 = arith.constant dense<0xFF800000> : vector<2xf32>
    %36 = vector.multi_reduction <maximumf>, %35, %cst_17 [1] : vector<2x8xf32> to vector<2xf32>
    %37 = vector.shape_cast %36 : vector<2xf32> to vector<2x1xf32>
    %38 = vector.broadcast %37 : vector<2x1xf32> to vector<2x8xf32>
    %39 = arith.subf %35, %38 : vector<2x8xf32>
    %40 = math.exp %39 : vector<2x8xf32>
    %cst_18 = arith.constant dense<0.000000e+00> : vector<2xf32>
    %41 = vector.multi_reduction <add>, %40, %cst_18 [1] : vector<2x8xf32> to vector<2xf32>
    %42 = vector.shape_cast %41 : vector<2xf32> to vector<2x1xf32>
    %43 = vector.broadcast %42 : vector<2x1xf32> to vector<2x8xf32>
    %44 = arith.divf %40, %43 : vector<2x8xf32>
    %c0_19 = arith.constant 0 : index
    %c0_20 = arith.constant 0 : index
    %45 = vector.load %arg4[%c0_19, %c0_20] : memref<2x8xf32, #tpu.memory_space<vmem>>, vector<2x8xf32>
    tpu.vector_store %arg4[%c0_19, %c0_20], %44 {strides = array<i32>} : memref<2x8xf32, #tpu.memory_space<vmem>>, vector<2x8xf32>,
    return
  }
}

</mosaic_0001>

<llo_original>
// kernel: dot_product_attention.1
$region0: #{dot_product_attention.1}
  #allocation0 [shape = 'u32[]', space=smem, size = 0x4, offset = 0x4, fixed_abs, tag = 'smem constant byte address 0x4 - core index']
  #allocation1 [shape = 'u32[144,128]{1,0:T(1,128)}', space=vmem, size = 0x12000, scoped, tag = 'internal scratch']
  %s0 = inlined_call_operand.hbm [shape: f32[2,8,32], index: 0, kind: input, shape index: {}]
  %s1 = inlined_call_operand.hbm [shape: f32[32,32], index: 1, kind: input, shape index: {}]
  %s2 = inlined_call_operand.hbm [shape: f32[32,32], index: 2, kind: input, shape index: {}]
  %s3 = inlined_call_operand.vmem [shape: f32[2,8], index: 3, kind: input, shape index: {}]
  %s4 = inlined_call_operand.hbm [shape: f32[2,8], index: 4, kind: output, shape index: {}]
  %s5 = sld [smem:[#allocation0]]
  $region38: #{dot_product_attention.1} parent=0
    _
  %s7 = ssub.s32 1, %s5
  %s8 = scalar_select 0, %s7, %s5
  $region1: #{dot_product_attention.1} parent=0
    #allocation2 [shape = 'u8[8192]{0}', space=vmem, size = 0x2000, scoped, tag = 'input window, operand 0, single buffered']
    #allocation3 [shape = 's32[1]{0}', space=sflag, size = 0x4, scoped, tag = 'scoped memory for dot_product_attention.1']
    #allocation4 [shape = 's32[1]{0}', space=sflag, size = 0x4, scoped, tag = 'scoped memory for dot_product_attention.1']
    #allocation5 [shape = 'u8[16384]{0}', space=vmem, size = 0x4000, scoped, tag = 'input window, operand 1, single buffered']
    #allocation6 [shape = 's32[1]{0}', space=sflag, size = 0x4, scoped, tag = 'scoped memory for dot_product_attention.1']
    #allocation7 [shape = 'u8[16384]{0}', space=vmem, size = 0x4000, scoped, tag = 'input window, operand 2, single buffered']
    #allocation8 [shape = 'u8[1024]{0}', space=vmem, size = 0x400, scoped, tag = 'output window, operand 0, single buffered']
    %9 = vsyncpa [#allocation3], 0
    %10 = vsyncpa [#allocation6], 0
    %11 = vsyncpa [#allocation4], 0
    // Predicated region
    $region2: #{dot_product_attention.1} parent=1 // pred_check
      _
    $region3: #{dot_product_attention.1} parent=1 // pred_check_branch
      %13 = sbr.rel (0) target = $region5
    $region4: #{dot_product_attention.1} parent=1 // pred_region
      %s15 = ssub.s32 256, 256
      %16 = vsyncadd [#allocation3], %s15
      %s17 = sshll.u32 [#allocation2], 4
      %s18 = int_to_ptr.vmem [resolvable:$true] %s17
      %23 = dma.hbm_to_vmem [thread:$0]  %s0, 256, %s18, [#allocation3], 128, 128, 8
    $region5: #{dot_product_attention.1} parent=1 // pred_fallthru
      _
    // Predicated region
    $region6: #{dot_product_attention.1} parent=1 // pred_check
      _
    $region7: #{dot_product_attention.1} parent=1 // pred_check_branch
      %25 = sbr.rel (0) target = $region9
    $region8: #{dot_product_attention.1} parent=1 // pred_region
      %s27 = ssub.s32 512, 512
      %28 = vsyncadd [#allocation6], %s27
      %s29 = sshll.u32 [#allocation5], 4
      %s30 = int_to_ptr.vmem [resolvable:$true] %s29
      %35 = dma.hbm_to_vmem [thread:$0]  %s1, 512, %s30, [#allocation6], 128, 128, 8
    $region9: #{dot_product_attention.1} parent=1 // pred_fallthru
      _
    // Predicated region
    $region10: #{dot_product_attention.1} parent=1 // pred_check
      _
    $region11: #{dot_product_attention.1} parent=1 // pred_check_branch
      %37 = sbr.rel (0) target = $region13
    $region12: #{dot_product_attention.1} parent=1 // pred_region
      %s39 = ssub.s32 512, 512
      %40 = vsyncadd [#allocation6], %s39
      %s41 = sshll.u32 [#allocation7], 4
      %s42 = int_to_ptr.vmem [resolvable:$true] %s41
      %47 = dma.hbm_to_vmem [thread:$0]  %s2, 512, %s42, [#allocation6], 128, 128, 8
    $region13: #{dot_product_attention.1} parent=1 // pred_fallthru
      _
    // Predicated region
    $region14: #{dot_product_attention.1} parent=1 // pred_check
      _
    $region15: #{dot_product_attention.1} parent=1 // pred_check_branch
      %49 = sbr.rel (0) target = $region17
    $region16: #{dot_product_attention.1} parent=1 // pred_region
      _
    $region17: #{dot_product_attention.1} parent=1 // pred_fallthru
      _
    // Predicated region
    $region18: #{dot_product_attention.1} parent=1 // pred_check
      _
    $region19: #{dot_product_attention.1} parent=1 // pred_check_branch
      %51 = sbr.rel (0) target = $region21
    $region20: #{dot_product_attention.1} parent=1 // pred_region
      %52 = dma.done [#allocation3], 256
    $region21: #{dot_product_attention.1} parent=1 // pred_fallthru
      _
    // Predicated region
    $region22: #{dot_product_attention.1} parent=1 // pred_check
      _
    $region23: #{dot_product_attention.1} parent=1 // pred_check_branch
      %54 = sbr.rel (0) target = $region25
    $region24: #{dot_product_attention.1} parent=1 // pred_region
      %55 = dma.done [#allocation6], 512
    $region25: #{dot_product_attention.1} parent=1 // pred_fallthru
      _
    // Predicated region
    $region26: #{dot_product_attention.1} parent=1 // pred_check
      _
    $region27: #{dot_product_attention.1} parent=1 // pred_check_branch
      %57 = sbr.rel (0) target = $region29
    $region28: #{dot_product_attention.1} parent=1 // pred_region
      %58 = dma.done [#allocation6], 512
    $region29: #{dot_product_attention.1} parent=1 // pred_fallthru
      _
    %v59 = vld [vmem:[#allocation2] sm:$0xff]
    %v60 = vld [vmem:[#allocation2 + $0x8] sm:$0xff]
    %v61 = vld [vmem:[#allocation5] sm:$0xff]
    %v62 = vld [vmem:[#allocation5 + $0x8] sm:$0xff]
    %v63 = vld [vmem:[#allocation5 + $0x10] sm:$0xff]
    %v64 = vld [vmem:[#allocation5 + $0x18] sm:$0xff]
    %v65 = vld [vmem:[#allocation7] sm:$0xff]
    %v66 = vld [vmem:[#allocation7 + $0x8] sm:$0xff]
    %v67 = vld [vmem:[#allocation7 + $0x10] sm:$0xff]
    %v68 = vld [vmem:[#allocation7 + $0x18] sm:$0xff]
    %v69 = vld [vmem:[%s3] sm:$0x3]
    %vm70 = vcmask 261120
    %v71 = vsel %vm70, %v59, 0.0
    %v72 = vrot.slane %v71, 4
    %v73 = vadd.f32 %v71, %v72
    %v74 = vrot.slane %v73, 2
    %v75 = vadd.f32 %v73, %v74
    %v76 = vrot.slane %v75, 1
    %v77 = vadd.f32 %v75, %v76
    %v78 = vsel %vm70, %v60, 0.0
    %v79 = vrot.slane %v78, 4
    %v80 = vadd.f32 %v78, %v79
    %v81 = vrot.slane %v80, 2
    %v82 = vadd.f32 %v80, %v81
    %v83 = vrot.slane %v82, 1
    %v84 = vadd.f32 %v82, %v83
    %v85 = vmul.f32 %v77, %v61
    %v86 = vmul.f32 %v77, %v62
    %v87 = vmul.f32 %v77, %v63
    %v88 = vmul.f32 %v77, %v64
    %v89 = vmul.f32 %v84, %v61
    %v90 = vmul.f32 %v84, %v62
    %v91 = vmul.f32 %v84, %v63
    %v92 = vmul.f32 %v84, %v64
    %v93 = vsel %vm70, %v85, 0.0
    %94 = vadd.xlane.f32.xlu0 %v93
    %v95 = vpop.xlane.xlu0 %94
    %v96 = vsel %vm70, %v86, 0.0
    %97 = vadd.xlane.f32.xlu0 %v96
    %v98 = vpop.xlane.xlu0 %97
    %v99 = vsel %vm70, %v87, 0.0
    %100 = vadd.xlane.f32.xlu0 %v99
    %v101 = vpop.xlane.xlu0 %100
    %v102 = vsel %vm70, %v88, 0.0
    %103 = vadd.xlane.f32.xlu0 %v102
    %v104 = vpop.xlane.xlu0 %103
    %v105 = vsel %vm70, %v89, 0.0
    %106 = vadd.xlane.f32.xlu0 %v105
    %v107 = vpop.xlane.xlu0 %106
    %v108 = vsel %vm70, %v90, 0.0
    %109 = vadd.xlane.f32.xlu0 %v108
    %v110 = vpop.xlane.xlu0 %109
    %v111 = vsel %vm70, %v91, 0.0
    %112 = vadd.xlane.f32.xlu0 %v111
    %v113 = vpop.xlane.xlu0 %112
    %v114 = vsel %vm70, %v92, 0.0
    %115 = vadd.xlane.f32.xlu0 %v114
    %v116 = vpop.xlane.xlu0 %115
    %v117 = vmul.f32 %v95, %v65
    %v118 = vmul.f32 %v98, %v66
    %v119 = vmul.f32 %v101, %v67
    %v120 = vmul.f32 %v104, %v68
    %v121 = vmul.f32 %v107, %v65
    %v122 = vmul.f32 %v110, %v66
    %v123 = vmul.f32 %v113, %v67
    %v124 = vmul.f32 %v116, %v68
    %v125 = vsel %vm70, %v117, 0.0
    %v126 = vsel %vm70, %v118, 0.0
    %v127 = vadd.f32 %v125, %v126
    %v128 = vsel %vm70, %v119, 0.0
    %v129 = vadd.f32 %v127, %v128
    %v130 = vsel %vm70, %v120, 0.0
    %v131 = vadd.f32 %v129, %v130
    %v132 = vrot.slane %v131, 4
    %v133 = vadd.f32 %v131, %v132
    %v134 = vrot.slane %v133, 2
    %v135 = vadd.f32 %v133, %v134
    %v136 = vrot.slane %v135, 1
    %v137 = vadd.f32 %v135, %v136
    %v138 = vsel %vm70, %v121, 0.0
    %v139 = vsel %vm70, %v122, 0.0
    %v140 = vadd.f32 %v138, %v139
    %v141 = vsel %vm70, %v123, 0.0
    %v142 = vadd.f32 %v140, %v141
    %v143 = vsel %vm70, %v124, 0.0
    %v144 = vadd.f32 %v142, %v143
    %v145 = vrot.slane %v144, 4
    %v146 = vadd.f32 %v144, %v145
    %v147 = vrot.slane %v146, 2
    %v148 = vadd.f32 %v146, %v147
    %v149 = vrot.slane %v148, 1
    %v150 = vadd.f32 %v148, %v149
    %v151 = vmul.f32 %v137, %v59
    %v152 = vmul.f32 %v150, %v60
    %v153 = vsel %vm70, %v151, 0.0
    %154 = vadd.xlane.f32.xlu0 %v153
    %v155 = vpop.xlane.xlu0 %154
    %v156 = vsel %vm70, %v152, 0.0
    %157 = vadd.xlane.f32.xlu0 %v156
    %v158 = vpop.xlane.xlu0 %157
    %v159 = vmul.f32 %v155, 0.022097087
    %v160 = vmul.f32 %v158, 0.022097087
    %v161 = vadd.f32 %v69, 1e-10
    %v162 = vlog2.pop %v161
    %v163 = vmul.f32 %v162, 0.6931472
    %v164 = vsub.f32 0.0, %v163
    %v165 = vadd.f32 %v164, 1e-10
    %v166 = vlog2.pop %v165
    %v167 = vmul.f32 %v166, 0.6931472
    %v168 = vsub.f32 0.0, %v167
    %v170 = vlaneseq
    %v171 = vshrl.u32 %v170, 7
    %v172 = vsub.s32 0, %v171
    %v173 = vrot.slane %v168, %v172
    %175 = vbcast.lane.b32.xlu0 %v173, 256
    %v176 = vpop.permute.xlu0 %175
    %v177 = vlaneseq
    %v178 = vshrl.u32 %v177, 7
    %v179 = vsub.s32 1, %v178
    %v180 = vrot.slane %v168, %v179
    %182 = vbcast.lane.b32.xlu0 %v180, 256
    %v183 = vpop.permute.xlu0 %182
    %v186 = vadd.f32 %v159, %v176
    %v187 = vadd.f32 %v160, %v183
    %190 = vset.pattern.permute.xlu0 0
    %191 = vperm.xlu0 %190, %v186
    %v192 = vpop.permute.xlu0 %191
    %193 = vset.pattern.permute.xlu0 0
    %194 = vperm.xlu0 %193, %v187
    %v195 = vpop.permute.xlu0 %194
    %v196 = vlaneseq
    %v197 = vand.u32 %v196, 127
    %v198 = vlaneseq
    %v199 = vshrl.u32 %v198, 7
    %v200 = vsub.s32 %v197, %v199
    %v201 = vrot.slane %v192, %v200
    %v202 = vlaneseq
    %v203 = vshrl.u32 %v202, 7
    %v204 = vsub.s32 %v197, %v203
    %v205 = vrot.slane %v195, %v204
    %vm206 = vcmask 1041409
    %v207 = vsel %vm206, %v205, %v201
    %vm209 = vcmask 58368
    %v210 = vsel %vm209, %v207, -inf
    %211 = vmax.xlane.f32.xlu0 %v210
    %v212 = vpop.xlane.xlu0 %211
    %v214 = vlaneseq
    %v215 = vshrl.u32 %v214, 7
    %v216 = vsub.s32 0, %v215
    %v217 = vrot.slane %v212, %v216
    %v218 = vlaneseq
    %v219 = vshrl.u32 %v218, 7
    %v220 = vsub.s32 1, %v219
    %v221 = vrot.slane %v212, %v220
    %v224 = vsub.f32 %v186, %v217
    %v225 = vsub.f32 %v187, %v221
    %v226 = vmul.f32 %v224, 1.442695
    %v227 = vpow.pop %v226
    %v228 = vmul.f32 %v225, 1.442695
    %v229 = vpow.pop %v228
    %232 = vset.pattern.permute.xlu0 0
    %233 = vperm.xlu0 %232, %v227
    %v234 = vpop.permute.xlu0 %233
    %235 = vset.pattern.permute.xlu0 0
    %236 = vperm.xlu0 %235, %v229
    %v237 = vpop.permute.xlu0 %236
    %v238 = vlaneseq
    %v239 = vshrl.u32 %v238, 7
    %v240 = vsub.s32 %v197, %v239
    %v241 = vrot.slane %v234, %v240
    %v242 = vlaneseq
    %v243 = vshrl.u32 %v242, 7
    %v244 = vsub.s32 %v197, %v243
    %v245 = vrot.slane %v237, %v244
    %v246 = vsel %vm206, %v245, %v241
    %v248 = vsel %vm209, %v246, 0.0
    %249 = vadd.xlane.f32.xlu0 %v248
    %v250 = vpop.xlane.xlu0 %249
    %v252 = vlaneseq
    %v253 = vshrl.u32 %v252, 7
    %v254 = vsub.s32 0, %v253
    %v255 = vrot.slane %v250, %v254
    %v256 = vlaneseq
    %v257 = vshrl.u32 %v256, 7
    %v258 = vsub.s32 1, %v257
    %v259 = vrot.slane %v250, %v258
    %v262 = vrcp.pop %v255
    %v263 = vmul.f32 %v227, %v262
    %v264 = vrcp.pop %v259
    %v265 = vmul.f32 %v229, %v264
    %268 = vset.pattern.permute.xlu0 0
    %269 = vperm.xlu0 %268, %v263
    %v270 = vpop.permute.xlu0 %269
    %271 = vset.pattern.permute.xlu0 0
    %272 = vperm.xlu0 %271, %v265
    %v273 = vpop.permute.xlu0 %272
    %v274 = vlaneseq
    %v275 = vshrl.u32 %v274, 7
    %v276 = vsub.s32 %v197, %v275
    %v277 = vrot.slane %v270, %v276
    %v278 = vlaneseq
    %v279 = vshrl.u32 %v278, 7
    %v280 = vsub.s32 %v197, %v279
    %v281 = vrot.slane %v273, %v280
    %v282 = vsel %vm206, %v281, %v277
    %284 = vst.msk [vmem:[#allocation8] sm:$0x3] %vm209, %v282
    // Predicated region
    $region30: #{dot_product_attention.1} parent=1 // pred_check
      _
    $region31: #{dot_product_attention.1} parent=1 // pred_check_branch
      %286 = sbr.rel (0) target = $region33
    $region32: #{dot_product_attention.1} parent=1 // pred_region
      %s288 = ssub.s32 32, 32
      %289 = vsyncadd [#allocation4], %s288
      %s291 = sshll.u32 [#allocation8], 4
      %s292 = int_to_ptr.vmem [resolvable:$true] %s291
      %294 = dma.vmem_to_hbm [thread:$0]  %s292, 32, %s4, [#allocation4]
    $region33: #{dot_product_attention.1} parent=1 // pred_fallthru
      _
    // Predicated region
    $region34: #{dot_product_attention.1} parent=1 // pred_check
      _
    $region35: #{dot_product_attention.1} parent=1 // pred_check_branch
      %296 = sbr.rel (0) target = $region37
    $region36: #{dot_product_attention.1} parent=1 // pred_region
      %297 = dma.done [#allocation4], 32
    $region37: #{dot_product_attention.1} parent=1 // pred_fallthru
      _
    %298 = vsyncpa [#allocation3], 1
    %299 = vsyncpa [#allocation6], 1
    %300 = vsyncpa [#allocation4], 1

</llo_original>
